<compile_context>
chip_gen: v7x
topology: tpu7x:2x2x1
jax: 0.10.0
libtpu: 0.0.40
codegen_flags: <defaults>
</compile_context>

<pallas_src>
import numpy as np

import jax
import jax.numpy as jnp
from jax.experimental import pallas as pl
from jax.experimental.pallas import tpu as pltpu


def mlp_kernel(x_ref, w1_ref, b1_ref, w2_ref, b2_ref, w3_ref, b3_ref, o_ref):
    """Whole 3-layer MLP on one (TILE_B, input_size) tile of rows."""
    wdt = w1_ref.dtype  # compute dtype of the matmul inputs (f32 or bf16)
    # Layer 1: Linear + ReLU (MXU matmul, f32 accumulation; epilogue in f32)
    h1 = jnp.dot(x_ref[...], w1_ref[...], preferred_element_type=jnp.float32)
    h1 = jnp.maximum(h1 + b1_ref[...], 0.0)
    # Layer 2: Linear + ReLU
    h2 = jnp.dot(h1.astype(wdt), w2_ref[...], preferred_element_type=jnp.float32)
    h2 = jnp.maximum(h2 + b2_ref[...], 0.0)
    # Layer 3: Linear + Identity
    y = jnp.dot(h2.astype(wdt), w3_ref[...], preferred_element_type=jnp.float32)
    o_ref[...] = y + b3_ref[...]


def _round_up(n, m):
    return ((n + m - 1) // m) * m


def mlp_forward(x, w1, b1, w2, b2, w3, b3, *,
                compute_dtype=jnp.bfloat16, tile_b=8192):
    """Run the MLP over a 1-D batch grid with VMEM-resident parameters."""
    batch, input_size = x.shape
    out_feats = w3.shape[1]

    # Sublane-packing granularity for the batch (second-minor) dim of the tile.
    gran = 16 if np.dtype(compute_dtype).itemsize == 2 else 8
    tile_b = _round_up(max(gran, min(tile_b, _round_up(batch, gran))), gran)
    batch_p = _round_up(batch, tile_b)
    if batch_p != batch:
        x = jnp.pad(x, ((0, batch_p - batch), (0, 0)))

    # Cast the HBM-heavy operands; biases stay f32 (f32 epilogue everywhere).
    xc = x.astype(compute_dtype)
    w1c, w2c, w3c = (w.astype(compute_dtype) for w in (w1, w2, w3))

    grid = (batch_p // tile_b,)
    in_specs = [
        pl.BlockSpec((tile_b, input_size), lambda i: (i, 0)),  # x: tiled over batch
        pl.BlockSpec(w1.shape, lambda i: (0, 0)),              # params: constant index
        pl.BlockSpec(b1.shape, lambda i: (0, 0)),              #   -> stay VMEM-resident
        pl.BlockSpec(w2.shape, lambda i: (0, 0)),
        pl.BlockSpec(b2.shape, lambda i: (0, 0)),
        pl.BlockSpec(w3.shape, lambda i: (0, 0)),
        pl.BlockSpec(b3.shape, lambda i: (0, 0)),
    ]
    out_specs = pl.BlockSpec((tile_b, out_feats), lambda i: (i, 0))

    out = pl.pallas_call(
        mlp_kernel,
        out_shape=jax.ShapeDtypeStruct((batch_p, out_feats), jnp.float32),
        grid=grid,
        in_specs=in_specs,
        out_specs=out_specs,
        compiler_params=pltpu.CompilerParams(
            dimension_semantics=("parallel",)),  # shard batch across v7x's 2 TCs
    )(xc, w1c, b1, w2c, b2, w3c, b3)

    return out[:batch]


def init_linear(key, fan_in, fan_out):
    """Mimic nn.Linear default init (uniform +/- 1/sqrt(fan_in)); W pre-transposed."""
    kw, kb = jax.random.split(key)
    bound = 1.0 / jnp.sqrt(float(fan_in))
    w = jax.random.uniform(kw, (fan_in, fan_out), jnp.float32, -bound, bound)
    b = jax.random.uniform(kb, (1, fan_out), jnp.float32, -bound, bound)
    return w, b


def _reference(x, w1, b1, w2, b2, w3, b3):
    h = jnp.maximum(x @ w1 + b1, 0.0)
    h = jnp.maximum(h @ w2 + b2, 0.0)
    return h @ w3 + b3


if __name__ == "__main__":
    # params = {'mlp_params': {'input_size': 16, 'hidden_sizes': [32, 32],
    #                          'activation': 'ReLU'}}
    input_size = 16
    hidden_sizes = [32, 32]
    batch = 8

    key = jax.random.PRNGKey(0)
    kx, k1, k2, k3 = jax.random.split(key, 4)

    x = jax.random.normal(kx, (batch, input_size), jnp.float32)
    w1, b1 = init_linear(k1, input_size, hidden_sizes[0])
    w2, b2 = init_linear(k2, hidden_sizes[0], hidden_sizes[1])
    w3, b3 = init_linear(k3, hidden_sizes[1], 1)

    y_ref = _reference(x, w1, b1, w2, b2, w3, b3)

    # 1) f32 compute path (exact semantics check).
    y32 = jax.block_until_ready(
        mlp_forward(x, w1, b1, w2, b2, w3, b3, compute_dtype=jnp.float32))
    assert y32.shape == (batch, 1)
    assert jnp.allclose(y32, y_ref, atol=1e-5, rtol=1e-5)

    # 2) bf16 compute path (default: halves HBM reads, f32 accumulation).
    ybf = jax.block_until_ready(mlp_forward(x, w1, b1, w2, b2, w3, b3))
    assert ybf.shape == (batch, 1)
    assert jnp.allclose(ybf, y_ref, atol=5e-2, rtol=5e-2)

    # 3) Ragged batch + multi-step grid (tail padding + VMEM-resident weights).
    batch2 = 200
    x2 = jax.random.normal(jax.random.PRNGKey(1), (batch2, input_size), jnp.float32)
    y2 = jax.block_until_ready(
        mlp_forward(x2, w1, b1, w2, b2, w3, b3,
                    compute_dtype=jnp.float32, tile_b=64))
    assert y2.shape == (batch2, 1)
    assert jnp.allclose(y2, _reference(x2, w1, b1, w2, b2, w3, b3),
                        atol=1e-5, rtol=1e-5)

    print("KERNEL_OK")
</pallas_src>

<mosaic_0001>
module attributes {stable_mosaic.version = 11 : i64} {
  func.func @mlp_kernel(%arg0: i32, %arg1: memref<8x16xf32, #tpu.memory_space<vmem>>, %arg2: memref<16x32xf32, #tpu.memory_space<vmem>>, %arg3: memref<1x32xf32, #tpu.memory_space<vmem>>, %arg4: memref<32x32xf32, #tpu.memory_space<vmem>>, %arg5: memref<1x32xf32, #tpu.memory_space<vmem>>, %arg6: memref<32x1xf32, #tpu.memory_space<vmem>>, %arg7: memref<1x1xf32, #tpu.memory_space<vmem>>, %arg8: memref<8x1xf32, #tpu.memory_space<vmem>>) attributes {dimension_semantics = [#tpu.dimension_semantics<parallel>], iteration_bounds = array<i64: 1>, scalar_prefetch = 0 : i64, scratch_operands = 0 : i64, tpu.core_type = #tpu.core_type<tc>, window_params = [{transform_indices = @transform_0, window_bounds = array<i64: 8, 16>}, {pipeline_mode = #tpu.pipeline_mode<synchronous>, transform_indices = @transform_1, window_bounds = array<i64: 16, 32>}, {pipeline_mode = #tpu.pipeline_mode<synchronous>, transform_indices = @transform_2, window_bounds = array<i64: 1, 32>}, {pipeline_mode = #tpu.pipeline_mode<synchronous>, transform_indices = @transform_3, window_bounds = array<i64: 32, 32>}, {pipeline_mode = #tpu.pipeline_mode<synchronous>, transform_indices = @transform_4, window_bounds = array<i64: 1, 32>}, {pipeline_mode = #tpu.pipeline_mode<synchronous>, transform_indices = @transform_5, window_bounds = array<i64: 32, 1>}, {pipeline_mode = #tpu.pipeline_mode<synchronous>, transform_indices = @transform_6, window_bounds = array<i64: 1, 1>}, {transform_indices = @transform_7, window_bounds = array<i64: 8, 1>}]} {
    %c0 = arith.constant 0 : index
    %c0_0 = arith.constant 0 : index
    %0 = vector.load %arg1[%c0, %c0_0] : memref<8x16xf32, #tpu.memory_space<vmem>>, vector<8x16xf32>
    %c0_1 = arith.constant 0 : index
    %c0_2 = arith.constant 0 : index
    %1 = vector.load %arg2[%c0_1, %c0_2] : memref<16x32xf32, #tpu.memory_space<vmem>>, vector<16x32xf32>
    %cst = arith.constant dense<0.000000e+00> : vector<8x32xf32>
    %2 = tpu.matmul %0, %1, %cst {dimension_numbers = #tpu.dot_dimension_numbers<[1], [0], [0], [1], [0, 0, 1, 1], [], []>} : vector<8x16xf32>, vector<16x32xf32>, vector<8x32xf32> -> vector<8x32xf32>
    %c0_3 = arith.constant 0 : index
    %c0_4 = arith.constant 0 : index
    %3 = vector.load %arg3[%c0_3, %c0_4] : memref<1x32xf32, #tpu.memory_space<vmem>>, vector<1x32xf32>
    %4 = vector.broadcast %3 : vector<1x32xf32> to vector<8x32xf32>
    %5 = arith.addf %2, %4 : vector<8x32xf32>
    %cst_5 = arith.constant 0.000000e+00 : f32
    %6 = vector.broadcast %cst_5 : f32 to vector<8x32xf32>
    %7 = arith.maximumf %5, %6 : vector<8x32xf32>
    %c0_6 = arith.constant 0 : index
    %c0_7 = arith.constant 0 : index
    %8 = vector.load %arg4[%c0_6, %c0_7] : memref<32x32xf32, #tpu.memory_space<vmem>>, vector<32x32xf32>
    %cst_8 = arith.constant dense<0.000000e+00> : vector<8x32xf32>
    %9 = tpu.matmul %7, %8, %cst_8 {dimension_numbers = #tpu.dot_dimension_numbers<[1], [0], [0], [1], [0, 0, 1, 1], [], []>} : vector<8x32xf32>, vector<32x32xf32>, vector<8x32xf32> -> vector<8x32xf32>
    %c0_9 = arith.constant 0 : index
    %c0_10 = arith.constant 0 : index
    %10 = vector.load %arg5[%c0_9, %c0_10] : memref<1x32xf32, #tpu.memory_space<vmem>>, vector<1x32xf32>
    %11 = vector.broadcast %10 : vector<1x32xf32> to vector<8x32xf32>
    %12 = arith.addf %9, %11 : vector<8x32xf32>
    %cst_11 = arith.constant 0.000000e+00 : f32
    %13 = vector.broadcast %cst_11 : f32 to vector<8x32xf32>
    %14 = arith.maximumf %12, %13 : vector<8x32xf32>
    %c0_12 = arith.constant 0 : index
    %c0_13 = arith.constant 0 : index
    %15 = vector.load %arg6[%c0_12, %c0_13] : memref<32x1xf32, #tpu.memory_space<vmem>>, vector<32x1xf32>
    %cst_14 = arith.constant dense<0.000000e+00> : vector<8x1xf32>
    %16 = tpu.matmul %14, %15, %cst_14 {dimension_numbers = #tpu.dot_dimension_numbers<[1], [0], [0], [1], [0, 0, 1, 1], [], []>} : vector<8x32xf32>, vector<32x1xf32>, vector<8x1xf32> -> vector<8x1xf32>
    %c0_15 = arith.constant 0 : index
    %c0_16 = arith.constant 0 : index
    %17 = vector.load %arg7[%c0_15, %c0_16] : memref<1x1xf32, #tpu.memory_space<vmem>>, vector<1x1xf32>
    %18 = vector.broadcast %17 : vector<1x1xf32> to vector<8x1xf32>
    %19 = arith.addf %16, %18 : vector<8x1xf32>
    %c0_17 = arith.constant 0 : index
    %c0_18 = arith.constant 0 : index
    %20 = vector.load %arg8[%c0_17, %c0_18] : memref<8x1xf32, #tpu.memory_space<vmem>>, vector<8x1xf32>
    tpu.vector_store %arg8[%c0_17, %c0_18], %19 {strides = array<i32>} : memref<8x1xf32, #tpu.memory_space<vmem>>, vector<8x1xf32>,
    return
  }
  func.func @transform_0(%arg0: i32) -> (i32, i32) {
    %c0_i32 = arith.constant 0 : i32
    %c0_i32_0 = arith.constant 0 : i32
    return %arg0, %c0_i32 : i32, i32
  }
  func.func @transform_1(%arg0: i32) -> (i32, i32) {
    %c0_i32 = arith.constant 0 : i32
    %c0_i32_0 = arith.constant 0 : i32
    %c0_i32_1 = arith.constant 0 : i32
    return %c0_i32, %c0_i32_0 : i32, i32
  }
  func.func @transform_2(%arg0: i32) -> (i32, i32) {
    %c0_i32 = arith.constant 0 : i32
    %c0_i32_0 = arith.constant 0 : i32
    %c0_i32_1 = arith.constant 0 : i32
    return %c0_i32, %c0_i32_0 : i32, i32
  }
  func.func @transform_3(%arg0: i32) -> (i32, i32) {
    %c0_i32 = arith.constant 0 : i32
    %c0_i32_0 = arith.constant 0 : i32
    %c0_i32_1 = arith.constant 0 : i32
    return %c0_i32, %c0_i32_0 : i32, i32
  }
  func.func @transform_4(%arg0: i32) -> (i32, i32) {
    %c0_i32 = arith.constant 0 : i32
    %c0_i32_0 = arith.constant 0 : i32
    %c0_i32_1 = arith.constant 0 : i32
    return %c0_i32, %c0_i32_0 : i32, i32
  }
  func.func @transform_5(%arg0: i32) -> (i32, i32) {
    %c0_i32 = arith.constant 0 : i32
    %c0_i32_0 = arith.constant 0 : i32
    %c0_i32_1 = arith.constant 0 : i32
    return %c0_i32, %c0_i32_0 : i32, i32
  }
  func.func @transform_6(%arg0: i32) -> (i32, i32) {
    %c0_i32 = arith.constant 0 : i32
    %c0_i32_0 = arith.constant 0 : i32
    %c0_i32_1 = arith.constant 0 : i32
    return %c0_i32, %c0_i32_0 : i32, i32
  }
  func.func @transform_7(%arg0: i32) -> (i32, i32) {
    %c0_i32 = arith.constant 0 : i32
    %c0_i32_0 = arith.constant 0 : i32
    return %arg0, %c0_i32 : i32, i32
  }
}

</mosaic_0001>

<llo_original>
// kernel: tpu_custom_call.1
$region0: #{tpu_custom_call.1}
  #allocation0 [shape = 'u32[]', space=smem, size = 0x4, offset = 0x4, fixed_abs, tag = 'smem constant byte address 0x4 - core index']
  #allocation1 [shape = 'u32[144,128]{1,0:T(1,128)}', space=vmem, size = 0x12000, scoped, tag = 'internal scratch']
  #allocation2 [shape = 'f32[1,1]{1,0:T(1,128)S(1)}', space=vmem, size = 0x200, scoped, tag = 'scoped memory for tpu_custom_call.1']
  %s0 = inlined_call_operand.hbm [shape: f32[8,16], index: 0, kind: input, shape index: {}]
  %s1 = inlined_call_operand.vmem [shape: f32[16,32], index: 1, kind: input, shape index: {}]
  %s2 = inlined_call_operand.hbm [shape: f32[1,32], index: 2, kind: input, shape index: {}]
  %s3 = inlined_call_operand.vmem [shape: f32[32,32], index: 3, kind: input, shape index: {}]
  %s4 = inlined_call_operand.vmem [shape: f32[1,32], index: 4, kind: input, shape index: {}]
  %s5 = inlined_call_operand.vmem [shape: f32[32,1], index: 5, kind: input, shape index: {}]
  %s6 = inlined_call_operand.<no memory space> [shape: f32[1,1], index: 6, kind: input, shape index: {}]
  %s7 = inlined_call_operand.vmem [shape: f32[8,1], index: 7, kind: output, shape index: {}]
  %s8 = sld [smem:[#allocation0]]
  $region46: #{tpu_custom_call.1} parent=0
    _
  %s10 = ssub.s32 1, %s8
  %s11 = scalar_select 0, %s10, %s8
  %v12 = vstv %s6
  %13 = vst [vmem:[#allocation2] sm:$0x1] %v12
  $region1: #{tpu_custom_call.1} parent=0
    #allocation3 [shape = 'u8[4096]{0}', space=vmem, size = 0x1000, scoped, tag = 'input window, operand 0, single buffered']
    #allocation4 [shape = 's32[1]{0}', space=sflag, size = 0x4, scoped, tag = 'scoped memory for tpu_custom_call.1']
    #allocation5 [shape = 'u8[512]{0}', space=vmem, size = 0x400, scoped, tag = 'input window, operand 2, single buffered']
    #allocation6 [shape = 's32[1]{0}', space=sflag, size = 0x4, scoped, tag = 'scoped memory for tpu_custom_call.1']
    %14 = vsyncpa [#allocation4], 0
    %15 = vsyncpa [#allocation6], 0
    // Predicated region
    $region2: #{tpu_custom_call.1} parent=1 // pred_check
      _
    $region3: #{tpu_custom_call.1} parent=1 // pred_check_branch
      %17 = sbr.rel (0) target = $region5
    $region4: #{tpu_custom_call.1} parent=1 // pred_region
      %s19 = ssub.s32 128, 128
      %20 = vsyncadd [#allocation4], %s19
      %s22 = sshll.u32 [#allocation3], 4
      %s23 = int_to_ptr.vmem [resolvable:$true] %s22
      %25 = dma.hbm_to_vmem [thread:$0]  %s0, 128, %s23, [#allocation4]
    $region5: #{tpu_custom_call.1} parent=1 // pred_fallthru
      _
    // Predicated region
    $region6: #{tpu_custom_call.1} parent=1 // pred_check
      _
    $region7: #{tpu_custom_call.1} parent=1 // pred_check_branch
      %27 = sbr.rel (0) target = $region9
    $region8: #{tpu_custom_call.1} parent=1 // pred_region
      _
    $region9: #{tpu_custom_call.1} parent=1 // pred_fallthru
      _
    // Predicated region
    $region10: #{tpu_custom_call.1} parent=1 // pred_check
      _
    $region11: #{tpu_custom_call.1} parent=1 // pred_check_branch
      %29 = sbr.rel (0) target = $region13
    $region12: #{tpu_custom_call.1} parent=1 // pred_region
      %s31 = ssub.s32 16, 16
      %32 = vsyncadd [#allocation6], %s31
      %s34 = sshll.u32 [#allocation5], 4
      %s35 = int_to_ptr.vmem [resolvable:$true] %s34
      %37 = dma.hbm_to_vmem [thread:$0]  %s2, 16, %s35, [#allocation6]
    $region13: #{tpu_custom_call.1} parent=1 // pred_fallthru
      _
    // Predicated region
    $region14: #{tpu_custom_call.1} parent=1 // pred_check
      _
    $region15: #{tpu_custom_call.1} parent=1 // pred_check_branch
      %39 = sbr.rel (0) target = $region17
    $region16: #{tpu_custom_call.1} parent=1 // pred_region
      _
    $region17: #{tpu_custom_call.1} parent=1 // pred_fallthru
      _
    // Predicated region
    $region18: #{tpu_custom_call.1} parent=1 // pred_check
      _
    $region19: #{tpu_custom_call.1} parent=1 // pred_check_branch
      %41 = sbr.rel (0) target = $region21
    $region20: #{tpu_custom_call.1} parent=1 // pred_region
      _
    $region21: #{tpu_custom_call.1} parent=1 // pred_fallthru
      _
    // Predicated region
    $region22: #{tpu_custom_call.1} parent=1 // pred_check
      _
    $region23: #{tpu_custom_call.1} parent=1 // pred_check_branch
      %43 = sbr.rel (0) target = $region25
    $region24: #{tpu_custom_call.1} parent=1 // pred_region
      _
    $region25: #{tpu_custom_call.1} parent=1 // pred_fallthru
      _
    // Predicated region
    $region26: #{tpu_custom_call.1} parent=1 // pred_check
      _
    $region27: #{tpu_custom_call.1} parent=1 // pred_check_branch
      %45 = sbr.rel (0) target = $region29
    $region28: #{tpu_custom_call.1} parent=1 // pred_region
      _
    $region29: #{tpu_custom_call.1} parent=1 // pred_fallthru
      _
    // Predicated region
    $region30: #{tpu_custom_call.1} parent=1 // pred_check
      _
    $region31: #{tpu_custom_call.1} parent=1 // pred_check_branch
      %47 = sbr.rel (0) target = $region33
    $region32: #{tpu_custom_call.1} parent=1 // pred_region
      %48 = dma.done [#allocation4], 128
    $region33: #{tpu_custom_call.1} parent=1 // pred_fallthru
      _
    // Predicated region
    $region34: #{tpu_custom_call.1} parent=1 // pred_check
      _
    $region35: #{tpu_custom_call.1} parent=1 // pred_check_branch
      %50 = sbr.rel (0) target = $region37
    $region36: #{tpu_custom_call.1} parent=1 // pred_region
      %51 = dma.done [#allocation6], 16
    $region37: #{tpu_custom_call.1} parent=1 // pred_fallthru
      _
    %v52 = vld [vmem:[#allocation3] sm:$0xff]
    %v53 = vld [vmem:[%s1] sm:$0xff]
    %v54 = vld [vmem:[%s1 + $0x8] sm:$0xff]
    %v55 = vld [vmem:[#allocation5] sm:$0x1]
    %v57 = vlaneseq
    %v58 = vshrl.u32 %v57, 7
    %v59 = vsub.s32 0, %v58
    %v60 = vrot.slane %v55, %v59
    %vm62 = vcmask 130048
    %v64 = vsel %vm62, %v52, 0
    %66 = vmatprep.subr.mxu0 0.0
    %67 = vmatpush1.msra.mxu0 %v53
    %68 = vmatprep.subr.mxu0 0.0
    %69 = vmatpush1.msra.mxu0 %v54
    %70 = vmatprep.subr.mxu0 0.0
    %71 = vmatpush1.msra.mxu0 0.0
    %72 = vmatprep.subr.mxu0 0.0
    %73 = vmatpush1.msra.mxu0 0.0
    %74 = vmatprep.subr.mxu0 0.0
    %75 = vmatpush1.msra.mxu0 0.0
    %76 = vmatprep.subr.mxu0 0.0
    %77 = vmatpush1.msra.mxu0 0.0
    %78 = vmatprep.subr.mxu0 0.0
    %79 = vmatpush1.msra.mxu0 0.0
    %80 = vmatprep.subr.mxu0 0.0
    %81 = vmatpush1.msra.mxu0 0.0
    %82 = vmatprep.subr.mxu0 0.0
    %83 = vmatpush1.msra.mxu0 0.0
    %84 = vmatprep.subr.mxu0 0.0
    %85 = vmatpush1.msra.mxu0 0.0
    %86 = vmatprep.subr.mxu0 0.0
    %87 = vmatpush1.msra.mxu0 0.0
    %88 = vmatprep.subr.mxu0 0.0
    %89 = vmatpush1.msra.mxu0 0.0
    %90 = vmatprep.subr.mxu0 0.0
    %91 = vmatpush1.msra.mxu0 0.0
    %92 = vmatprep.subr.mxu0 0.0
    %93 = vmatpush1.msra.mxu0 0.0
    %94 = vmatprep.subr.mxu0 0.0
    %95 = vmatpush1.msra.mxu0 0.0
    %96 = vmatprep.subr.mxu0 0.0
    %97 = vmatpush1.msra.mxu0 0.0
    %98 = vmatprep.subr.mxu0 0.0
    %99 = vmatpush1.msra.mxu0 0.0
    %100 = vmatprep.subr.mxu0 0.0
    %101 = vmatpush1.msra.mxu0 0.0
    %102 = vmatprep.subr.mxu0 0.0
    %103 = vmatpush1.msra.mxu0 0.0
    %104 = vmatprep.subr.mxu0 0.0
    %105 = vmatpush1.msra.mxu0 0.0
    %106 = vmatprep.subr.mxu0 0.0
    %107 = vmatpush1.msra.mxu0 0.0
    %108 = vmatprep.subr.mxu0 0.0
    %109 = vmatpush1.msra.mxu0 0.0
    %110 = vmatprep.subr.mxu0 0.0
    %111 = vmatpush1.msra.mxu0 0.0
    %112 = vmatprep.subr.mxu0 0.0
    %113 = vmatpush1.msra.mxu0 0.0
    %114 = vmatprep.subr.mxu0 0.0
    %115 = vmatpush1.msra.mxu0 0.0
    %116 = vmatprep.subr.mxu0 0.0
    %117 = vmatpush1.msra.mxu0 0.0
    %118 = vmatprep.subr.mxu0 0.0
    %119 = vmatpush1.msra.mxu0 0.0
    %120 = vmatprep.subr.mxu0 0.0
    %121 = vmatpush1.msra.mxu0 0.0
    %122 = vmatprep.subr.mxu0 0.0
    %123 = vmatpush1.msra.mxu0 0.0
    %124 = vmatprep.subr.mxu0 0.0
    %125 = vmatpush1.msra.mxu0 0.0
    %126 = vmatprep.subr.mxu0 0.0
    %127 = vmatpush1.msra.mxu0 0.0
    %128 = vmatprep.subr.mxu0 0.0
    %129 = vmatpush1.msra.mxu0 0.0
    %130 = vmatprep.mubr.f32.mxu0 0.0
    %131 = vmatmul.mubr.f32.gmra.mrb[0].mxu0 %v64
    %v132 = vpop.f32.mrb[0].mxu0
    %v133 = vadd.f32 %v60, %v132
    %v134 = vpop.f32.mrb[0].mxu0
    %135 = vdwg.mxu0
    %v136 = vmax.f32 %v133, 0.0
    %v137 = vld [vmem:[%s3] sm:$0xff]
    %v138 = vld [vmem:[%s3 + $0x8] sm:$0xff]
    %v139 = vld [vmem:[%s3 + $0x10] sm:$0xff]
    %v140 = vld [vmem:[%s3 + $0x18] sm:$0xff]
    %v141 = vld [vmem:[%s4] sm:$0x1]
    %v143 = vlaneseq
    %v144 = vshrl.u32 %v143, 7
    %v145 = vsub.s32 0, %v144
    %v146 = vrot.slane %v141, %v145
    %vm148 = vcmask 261120
    %v150 = vsel %vm148, %v136, 0
    %152 = vmatprep.subr.mxu0 0.0
    %153 = vmatpush1.msra.mxu0 %v137
    %154 = vmatprep.subr.mxu0 0.0
    %155 = vmatpush1.msra.mxu0 %v138
    %156 = vmatprep.subr.mxu0 0.0
    %157 = vmatpush1.msra.mxu0 %v139
    %158 = vmatprep.subr.mxu0 0.0
    %159 = vmatpush1.msra.mxu0 %v140
    %160 = vmatprep.subr.mxu0 0.0
    %161 = vmatpush1.msra.mxu0 0.0
    %162 = vmatprep.subr.mxu0 0.0
    %163 = vmatpush1.msra.mxu0 0.0
    %164 = vmatprep.subr.mxu0 0.0
    %165 = vmatpush1.msra.mxu0 0.0
    %166 = vmatprep.subr.mxu0 0.0
    %167 = vmatpush1.msra.mxu0 0.0
    %168 = vmatprep.subr.mxu0 0.0
    %169 = vmatpush1.msra.mxu0 0.0
    %170 = vmatprep.subr.mxu0 0.0
    %171 = vmatpush1.msra.mxu0 0.0
    %172 = vmatprep.subr.mxu0 0.0
    %173 = vmatpush1.msra.mxu0 0.0
    %174 = vmatprep.subr.mxu0 0.0
    %175 = vmatpush1.msra.mxu0 0.0
    %176 = vmatprep.subr.mxu0 0.0
    %177 = vmatpush1.msra.mxu0 0.0
    %178 = vmatprep.subr.mxu0 0.0
    %179 = vmatpush1.msra.mxu0 0.0
    %180 = vmatprep.subr.mxu0 0.0
    %181 = vmatpush1.msra.mxu0 0.0
    %182 = vmatprep.subr.mxu0 0.0
    %183 = vmatpush1.msra.mxu0 0.0
    %184 = vmatprep.subr.mxu0 0.0
    %185 = vmatpush1.msra.mxu0 0.0
    %186 = vmatprep.subr.mxu0 0.0
    %187 = vmatpush1.msra.mxu0 0.0
    %188 = vmatprep.subr.mxu0 0.0
    %189 = vmatpush1.msra.mxu0 0.0
    %190 = vmatprep.subr.mxu0 0.0
    %191 = vmatpush1.msra.mxu0 0.0
    %192 = vmatprep.subr.mxu0 0.0
    %193 = vmatpush1.msra.mxu0 0.0
    %194 = vmatprep.subr.mxu0 0.0
    %195 = vmatpush1.msra.mxu0 0.0
    %196 = vmatprep.subr.mxu0 0.0
    %197 = vmatpush1.msra.mxu0 0.0
    %198 = vmatprep.subr.mxu0 0.0
    %199 = vmatpush1.msra.mxu0 0.0
    %200 = vmatprep.subr.mxu0 0.0
    %201 = vmatpush1.msra.mxu0 0.0
    %202 = vmatprep.subr.mxu0 0.0
    %203 = vmatpush1.msra.mxu0 0.0
    %204 = vmatprep.subr.mxu0 0.0
    %205 = vmatpush1.msra.mxu0 0.0
    %206 = vmatprep.subr.mxu0 0.0
    %207 = vmatpush1.msra.mxu0 0.0
    %208 = vmatprep.subr.mxu0 0.0
    %209 = vmatpush1.msra.mxu0 0.0
    %210 = vmatprep.subr.mxu0 0.0
    %211 = vmatpush1.msra.mxu0 0.0
    %212 = vmatprep.subr.mxu0 0.0
    %213 = vmatpush1.msra.mxu0 0.0
    %214 = vmatprep.subr.mxu0 0.0
    %215 = vmatpush1.msra.mxu0 0.0
    %216 = vmatprep.mubr.f32.mxu0 0.0
    %217 = vmatmul.mubr.f32.gmra.mrb[0].mxu0 %v150
    %v218 = vpop.f32.mrb[0].mxu0
    %v219 = vadd.f32 %v146, %v218
    %v220 = vpop.f32.mrb[0].mxu0
    %221 = vdwg.mxu0
    %v222 = vmax.f32 %v219, 0.0
    %v223 = vld [vmem:[%s5] sm:$0xff]
    %v224 = vld [vmem:[%s5 + $0x8] sm:$0xff]
    %v225 = vld [vmem:[%s5 + $0x10] sm:$0xff]
    %v226 = vld [vmem:[%s5 + $0x18] sm:$0xff]
    %v227 = vld [vmem:[#allocation2] sm:$0x1]
    %v229 = vlaneseq
    %v230 = vshrl.u32 %v229, 7
    %v231 = vsub.s32 0, %v230
    %v232 = vrot.slane %v227, %v231
    %v235 = vsel %vm148, %v222, 0
    %237 = vmatprep.subr.mxu0 0.0
    %238 = vmatpush1.msra.mxu0 %v223
    %239 = vmatprep.subr.mxu0 0.0
    %240 = vmatpush1.msra.mxu0 %v224
    %241 = vmatprep.subr.mxu0 0.0
    %242 = vmatpush1.msra.mxu0 %v225
    %243 = vmatprep.subr.mxu0 0.0
    %244 = vmatpush1.msra.mxu0 %v226
    %245 = vmatprep.subr.mxu0 0.0
    %246 = vmatpush1.msra.mxu0 0.0
    %247 = vmatprep.subr.mxu0 0.0
    %248 = vmatpush1.msra.mxu0 0.0
    %249 = vmatprep.subr.mxu0 0.0
    %250 = vmatpush1.msra.mxu0 0.0
    %251 = vmatprep.subr.mxu0 0.0
    %252 = vmatpush1.msra.mxu0 0.0
    %253 = vmatprep.subr.mxu0 0.0
    %254 = vmatpush1.msra.mxu0 0.0
    %255 = vmatprep.subr.mxu0 0.0
    %256 = vmatpush1.msra.mxu0 0.0
    %257 = vmatprep.subr.mxu0 0.0
    %258 = vmatpush1.msra.mxu0 0.0
    %259 = vmatprep.subr.mxu0 0.0
    %260 = vmatpush1.msra.mxu0 0.0
    %261 = vmatprep.subr.mxu0 0.0
    %262 = vmatpush1.msra.mxu0 0.0
    %263 = vmatprep.subr.mxu0 0.0
    %264 = vmatpush1.msra.mxu0 0.0
    %265 = vmatprep.subr.mxu0 0.0
    %266 = vmatpush1.msra.mxu0 0.0
    %267 = vmatprep.subr.mxu0 0.0
    %268 = vmatpush1.msra.mxu0 0.0
    %269 = vmatprep.subr.mxu0 0.0
    %270 = vmatpush1.msra.mxu0 0.0
    %271 = vmatprep.subr.mxu0 0.0
    %272 = vmatpush1.msra.mxu0 0.0
    %273 = vmatprep.subr.mxu0 0.0
    %274 = vmatpush1.msra.mxu0 0.0
    %275 = vmatprep.subr.mxu0 0.0
    %276 = vmatpush1.msra.mxu0 0.0
    %277 = vmatprep.subr.mxu0 0.0
    %278 = vmatpush1.msra.mxu0 0.0
    %279 = vmatprep.subr.mxu0 0.0
    %280 = vmatpush1.msra.mxu0 0.0
    %281 = vmatprep.subr.mxu0 0.0
    %282 = vmatpush1.msra.mxu0 0.0
    %283 = vmatprep.subr.mxu0 0.0
    %284 = vmatpush1.msra.mxu0 0.0
    %285 = vmatprep.subr.mxu0 0.0
    %286 = vmatpush1.msra.mxu0 0.0
    %287 = vmatprep.subr.mxu0 0.0
    %288 = vmatpush1.msra.mxu0 0.0
    %289 = vmatprep.subr.mxu0 0.0
    %290 = vmatpush1.msra.mxu0 0.0
    %291 = vmatprep.subr.mxu0 0.0
    %292 = vmatpush1.msra.mxu0 0.0
    %293 = vmatprep.subr.mxu0 0.0
    %294 = vmatpush1.msra.mxu0 0.0
    %295 = vmatprep.subr.mxu0 0.0
    %296 = vmatpush1.msra.mxu0 0.0
    %297 = vmatprep.subr.mxu0 0.0
    %298 = vmatpush1.msra.mxu0 0.0
    %299 = vmatprep.subr.mxu0 0.0
    %300 = vmatpush1.msra.mxu0 0.0
    %301 = vmatprep.mubr.f32.mxu0 0.0
    %302 = vmatmul.mubr.f32.gmra.mrb[0].mxu0 %v235
    %v303 = vpop.f32.mrb[0].mxu0
    %v304 = vadd.f32 %v232, %v303
    %v305 = vpop.f32.mrb[0].mxu0
    %306 = vdwg.mxu0
    %vm307 = vcmask 7168
    %308 = vst.msk [vmem:[%s7] sm:$0xff] %vm307, %v304
    // Predicated region
    $region38: #{tpu_custom_call.1} parent=1 // pred_check
      _
    $region39: #{tpu_custom_call.1} parent=1 // pred_check_branch
      %310 = sbr.rel (0) target = $region41
    $region40: #{tpu_custom_call.1} parent=1 // pred_region
      _
    $region41: #{tpu_custom_call.1} parent=1 // pred_fallthru
      _
    // Predicated region
    $region42: #{tpu_custom_call.1} parent=1 // pred_check
      _
    $region43: #{tpu_custom_call.1} parent=1 // pred_check_branch
      %312 = sbr.rel (0) target = $region45
    $region44: #{tpu_custom_call.1} parent=1 // pred_region
      _
    $region45: #{tpu_custom_call.1} parent=1 // pred_fallthru
      _
    %313 = vsyncpa [#allocation4], 1
    %314 = vsyncpa [#allocation6], 1

</llo_original>
